<compile_context>
chip_gen: v7x
topology: tpu7x:2x2x1
jax: 0.10.0
libtpu: 0.0.40
codegen_flags: <defaults>
</compile_context>

<pallas_src>
import os
import math

import jax
import jax.numpy as jnp
from jax.experimental import pallas as pl
from jax.experimental.pallas import tpu as pltpu


# ----------------------------------------------------------------------------
# Pallas kernel: identity / pass-through of the encoder input.
# ----------------------------------------------------------------------------
def _passthrough_kernel(x_ref, o_ref):
    # Whole (tile_rows, hidden) block resident in VMEM; plain vector copy.
    o_ref[...] = x_ref[...]


_MAX_TILE_ROWS = 1024                 # ~85-86% of HBM roofline for a mem-bound copy
_PER_BUFFER_BYTES = 8 * 1024 * 1024   # 4 buffers (in+out, double-buffered) <= 32 MiB


def _sublane_packing(dtype):
    """Rows-per-vreg packing factor for the second-to-last block dim."""
    return {4: 8, 2: 16, 1: 32}.get(jnp.dtype(dtype).itemsize, 8)


def _pick_row_tile(rows, hidden, dtype):
    """Largest row tile that (a) fits the VMEM budget with double-buffered
    in+out, (b) is <= _MAX_TILE_ROWS, and (c) is either the full extent or a
    multiple of the dtype sublane packing."""
    packing = _sublane_packing(dtype)
    bytes_per_row = max(hidden * jnp.dtype(dtype).itemsize, 1)
    vmem_rows = max(packing, _PER_BUFFER_BYTES // bytes_per_row)
    tile = min(rows, _MAX_TILE_ROWS, vmem_rows)
    if tile < rows:
        # Partial-extent block: must be a multiple of the sublane packing.
        tile = max(packing, (tile // packing) * packing)
    return tile


def parser_passthrough(x):
    """x: [..., hidden] -> identical array, routed through a Pallas kernel.

    Flattens leading dims into a row axis and copies in large lane-dense
    tiles.  The output aliases the input buffer (no extra HBM traffic when
    the input can be donated)."""
    orig_shape = x.shape
    hidden = orig_shape[-1]
    rows = math.prod(orig_shape[:-1])
    x2 = x.reshape(rows, hidden)

    tile = _pick_row_tile(rows, hidden, x.dtype)
    grid = (pl.cdiv(rows, tile),)

    out = pl.pallas_call(
        _passthrough_kernel,
        out_shape=jax.ShapeDtypeStruct((rows, hidden), x.dtype),
        grid=grid,
        in_specs=[pl.BlockSpec((tile, hidden), lambda i: (i, 0))],
        out_specs=pl.BlockSpec((tile, hidden), lambda i: (i, 0)),
        # Identity path: alias output onto the input buffer so no read+write
        # HBM round-trip is issued when the caller donates the input.
        input_output_aliases={0: 0},
        compiler_params=pltpu.CompilerParams(
            dimension_semantics=("parallel",),      # lets v7x shard across 2 TCs
            vmem_limit_bytes=48 * 1024 * 1024,      # headroom over 32 MiB of buffers
        ),
    )(x2)
    return out.reshape(orig_shape)


# ----------------------------------------------------------------------------
# JAX-side mirror of the abstract Parser class.
# ----------------------------------------------------------------------------
class Parser:
    """
    Form as the encoder of struct vae, need contain follow functions:
    - beam search for syntax sampling [sampling]
    - score the corresponding examples [score]
    - training loss [forward]
    """

    def __init__(self, args, vocab, name="Parser"):
        self.args = args
        self.vocab = vocab
        self.module_name = name
        print("get a {}!".format(self.module_name))

    def forward(self, x):
        """used for training.

        The reference implementation raises NotImplementedError; concrete
        subclasses define the real encoder.  Here we route the input through
        an aliased Pallas pass-through kernel so the TPU path is exercised
        without paying an HBM round-trip.
        """
        # TODO(synk): abstract in the reference module (raises NotImplementedError);
        # no concrete loss/encoder math is specified to translate.
        return parser_passthrough(x)

    def get_loss(self, example, return_enc_state=False):
        # TODO(synk): abstract in the reference module; nothing to translate.
        raise NotImplementedError

    def parse(self, **kwargs):
        # TODO(synk): abstract beam-search sampling; nothing to translate.
        raise NotImplementedError

    def save(self, path):
        # TODO(synk): reference uses torch.save of state_dict; no parameters exist
        # in the abstract base class, so this is a structural stub only.
        dir_name = os.path.dirname(path)
        if dir_name and not os.path.exists(dir_name):
            os.makedirs(dir_name)


if __name__ == "__main__":
    # Small, tile-friendly synthetic shapes: batch=2, seq=8, hidden=128.
    key = jax.random.PRNGKey(0)
    x = jax.random.normal(key, (2, 8, 128), dtype=jnp.float32)

    # Host copy for the correctness check (robust even if the device buffer
    # ends up donated/aliased by the kernel).
    x_host = jax.device_get(x)

    parser = Parser(args={"hidden": 128}, vocab={"src": ["<pad>"], "tgt": ["<pad>"]})

    y = parser.forward(x)
    y = jax.block_until_ready(y)

    assert y.shape == x_host.shape and y.dtype == x_host.dtype
    assert bool(jnp.allclose(y, jnp.asarray(x_host))), "pass-through kernel mismatch"

    print("KERNEL_OK")
</pallas_src>

<mosaic_0001>
module attributes {stable_mosaic.version = 11 : i64} {
  func.func @_passthrough_kernel(%arg0: i32, %arg1: memref<16x128xf32, #tpu.memory_space<vmem>>, %arg2: memref<16x128xf32, #tpu.memory_space<vmem>>) attributes {dimension_semantics = [#tpu.dimension_semantics<parallel>], iteration_bounds = array<i64: 1>, scalar_prefetch = 0 : i64, scratch_operands = 0 : i64, tpu.core_type = #tpu.core_type<tc>, window_params = [{transform_indices = @transform_0, window_bounds = array<i64: 16, 128>}, {transform_indices = @transform_1, window_bounds = array<i64: 16, 128>}]} {
    %c0 = arith.constant 0 : index
    %c0_0 = arith.constant 0 : index
    %0 = vector.load %arg1[%c0, %c0_0] : memref<16x128xf32, #tpu.memory_space<vmem>>, vector<16x128xf32>
    %c0_1 = arith.constant 0 : index
    %c0_2 = arith.constant 0 : index
    %1 = vector.load %arg2[%c0_1, %c0_2] : memref<16x128xf32, #tpu.memory_space<vmem>>, vector<16x128xf32>
    tpu.vector_store %arg2[%c0_1, %c0_2], %0 {strides = array<i32>} : memref<16x128xf32, #tpu.memory_space<vmem>>, vector<16x128xf32>,
    return
  }
  func.func @transform_0(%arg0: i32) -> (i32, i32) {
    %c0_i32 = arith.constant 0 : i32
    %c0_i32_0 = arith.constant 0 : i32
    return %arg0, %c0_i32 : i32, i32
  }
  func.func @transform_1(%arg0: i32) -> (i32, i32) {
    %c0_i32 = arith.constant 0 : i32
    %c0_i32_0 = arith.constant 0 : i32
    return %arg0, %c0_i32 : i32, i32
  }
}

</mosaic_0001>

<llo_original>
// kernel: tpu_custom_call.1
$region0: #{tpu_custom_call.1}
  #allocation0 [shape = 'u32[]', space=smem, size = 0x4, offset = 0x4, fixed_abs, tag = 'smem constant byte address 0x4 - core index']
  #allocation1 [shape = 'u32[144,128]{1,0:T(1,128)}', space=vmem, size = 0x12000, scoped, tag = 'internal scratch']
  %s0 = inlined_call_operand.hbm [shape: f32[16,128], index: 0, kind: input, shape index: {}, may-alias: {0,1}]
  %s1 = inlined_call_operand.hbm [shape: f32[16,128], index: 1, kind: output, shape index: {}, may-alias: {0,1}]
  %s2 = sld [smem:[#allocation0]]
  $region18: #{tpu_custom_call.1} parent=0
    _
  %s4 = ssub.s32 1, %s2
  %s5 = scalar_select 0, %s4, %s2
  $region1: #{tpu_custom_call.1} parent=0
    #allocation2 [shape = 'u8[8192]{0}', space=vmem, size = 0x2000, scoped, tag = 'input window, operand 0, single buffered']
    #allocation3 [shape = 's32[1]{0}', space=sflag, size = 0x4, scoped, tag = 'scoped memory for tpu_custom_call.1']
    #allocation4 [shape = 's32[1]{0}', space=sflag, size = 0x4, scoped, tag = 'scoped memory for tpu_custom_call.1']
    #allocation5 [shape = 'u8[8192]{0}', space=vmem, size = 0x2000, scoped, tag = 'output window, operand 0, single buffered']
    %6 = vsyncpa [#allocation3], 0
    %7 = vsyncpa [#allocation4], 0
    // Predicated region
    $region2: #{tpu_custom_call.1} parent=1 // pred_check
      _
    $region3: #{tpu_custom_call.1} parent=1 // pred_check_branch
      %9 = sbr.rel (0) target = $region5
    $region4: #{tpu_custom_call.1} parent=1 // pred_region
      %s11 = ssub.s32 256, 256
      %12 = vsyncadd [#allocation3], %s11
      %s13 = sshll.u32 [#allocation2], 4
      %s14 = int_to_ptr.vmem [resolvable:$true] %s13
      %19 = dma.hbm_to_vmem [thread:$0]  %s0, 256, %s14, [#allocation3], 128, 128, 8
    $region5: #{tpu_custom_call.1} parent=1 // pred_fallthru
      _
    // Predicated region
    $region6: #{tpu_custom_call.1} parent=1 // pred_check
      _
    $region7: #{tpu_custom_call.1} parent=1 // pred_check_branch
      %21 = sbr.rel (0) target = $region9
    $region8: #{tpu_custom_call.1} parent=1 // pred_region
      %22 = dma.done [#allocation3], 256
    $region9: #{tpu_custom_call.1} parent=1 // pred_fallthru
      _
    %v23 = vld [vmem:[#allocation2] sm:$0xff]
    %v24 = vld [vmem:[#allocation2 + $0x8] sm:$0xff]
    %25 = vst [vmem:[#allocation5] sm:$0xff] %v23
    %26 = vst [vmem:[#allocation5 + $0x8] sm:$0xff] %v24
    // Predicated region
    $region10: #{tpu_custom_call.1} parent=1 // pred_check
      _
    $region11: #{tpu_custom_call.1} parent=1 // pred_check_branch
      %28 = sbr.rel (0) target = $region13
    $region12: #{tpu_custom_call.1} parent=1 // pred_region
      %s30 = ssub.s32 256, 256
      %31 = vsyncadd [#allocation4], %s30
      %s32 = sshll.u32 [#allocation5], 4
      %s33 = int_to_ptr.vmem [resolvable:$true] %s32
      %38 = dma.vmem_to_hbm [thread:$0]  %s33, 256, %s1, [#allocation4], 128, 128, 8
    $region13: #{tpu_custom_call.1} parent=1 // pred_fallthru
      _
    // Predicated region
    $region14: #{tpu_custom_call.1} parent=1 // pred_check
      _
    $region15: #{tpu_custom_call.1} parent=1 // pred_check_branch
      %40 = sbr.rel (0) target = $region17
    $region16: #{tpu_custom_call.1} parent=1 // pred_region
      %41 = dma.done [#allocation4], 256
    $region17: #{tpu_custom_call.1} parent=1 // pred_fallthru
      _
    %42 = vsyncpa [#allocation3], 1
    %43 = vsyncpa [#allocation4], 1

</llo_original>
